<compile_context>
chip_gen: v7x
topology: tpu7x:2x2x1
jax: 0.10.0
libtpu: 0.0.40
codegen_flags: <defaults>
</compile_context>

<pallas_src>
import functools

import jax
import jax.numpy as jnp
from jax.experimental import pallas as pl
from jax.experimental.pallas import tpu as pltpu

EPS = 1e-5
_LANE = 128


def _dice_multiclass_kernel(pred_ref, tgt_ref, loss_ref, inter_acc, denom_acc,
                            *, from_logits, hw, hw_tile, need_mask):
    h = pl.program_id(1)

    @pl.when(h == 0)
    def _():
        inter_acc[...] = jnp.zeros_like(inter_acc)
        denom_acc[...] = jnp.zeros_like(denom_acc)

    x = pred_ref[0].astype(jnp.float32)            # (C, hw_tile)
    C = x.shape[0]
    labels = tgt_ref[0].astype(jnp.int32)          # (1, hw_tile)

    if need_mask:
        lane = jax.lax.broadcasted_iota(jnp.int32, x.shape, 1) + h * hw_tile
        valid = lane < hw
        # Mask logits *before* exp so garbage in the padded lanes can never
        # produce inf/NaN, then re-mask the probabilities afterwards.
        x = jnp.where(valid, x, 0.0)

    if from_logits:
        m = jnp.max(x, axis=0, keepdims=True)      # softmax over channel axis
        e = jnp.exp(x - m)
        p = e / jnp.sum(e, axis=0, keepdims=True)
    else:
        p = x

    cls_idx = jax.lax.broadcasted_iota(jnp.int32, x.shape, 0)
    onehot = (cls_idx == labels).astype(jnp.float32)

    if need_mask:
        p = jnp.where(valid, p, 0.0)
        onehot = jnp.where(valid, onehot, 0.0)

    # Two lane reductions per tile (denominator fused: sum(p) + sum(1hot) ==
    # sum(p + 1hot)); partials accumulate sublane-major -> no relayout per tile.
    inter_acc[...] += jnp.sum(p * onehot, axis=-1, keepdims=True)   # (C, 1)
    denom_acc[...] += jnp.sum(p + onehot, axis=-1, keepdims=True)   # (C, 1)

    @pl.when(h == pl.num_programs(1) - 1)
    def _():
        dice = (2.0 * inter_acc[...] + EPS) / (denom_acc[...] + EPS)  # (C, 1)
        loss_ref[...] = (1.0 - dice).reshape(1, C, 1)


def _dice_binary_kernel(pred_ref, tgt_ref, loss_ref, inter_acc, denom_acc,
                        *, from_logits, hw, hw_tile, need_mask):
    h = pl.program_id(1)

    @pl.when(h == 0)
    def _():
        inter_acc[...] = jnp.zeros_like(inter_acc)
        denom_acc[...] = jnp.zeros_like(denom_acc)

    x = pred_ref[0].astype(jnp.float32)            # (C, hw_tile)
    t = tgt_ref[0].astype(jnp.float32)             # (C, hw_tile)
    C = x.shape[0]

    if need_mask:
        lane = jax.lax.broadcasted_iota(jnp.int32, x.shape, 1) + h * hw_tile
        valid = lane < hw
        x = jnp.where(valid, x, 0.0)
        t = jnp.where(valid, t, 0.0)

    p = jax.nn.sigmoid(x) if from_logits else x
    if need_mask:
        p = jnp.where(valid, p, 0.0)               # sigmoid(0) = 0.5 otherwise

    inter_acc[...] += jnp.sum(p * t, axis=-1, keepdims=True)        # (C, 1)
    denom_acc[...] += jnp.sum(p + t, axis=-1, keepdims=True)        # (C, 1)

    @pl.when(h == pl.num_programs(1) - 1)
    def _():
        dice = (2.0 * inter_acc[...] + EPS) / (denom_acc[...] + EPS)
        loss_ref[...] = (1.0 - dice).reshape(1, C, 1)


def _pick_hw_tile(hw, c, itemsize):
    """Lane-aligned HW tile keeping one pred block ~<= 4 MiB (fits every gen)."""
    if hw % _LANE != 0:
        # A full-extent block is always legal (equal to the array dim).
        return hw
    max_lanes = ((4 << 20) // max(1, c * itemsize)) // _LANE * _LANE
    max_lanes = max(_LANE, max_lanes)
    return int(min(hw, max_lanes, 32768))


def dice_loss(y_pred, y_target, *, mode, from_logits=True, reduce=True,
              hw_tile=None):
    """Matches cmr_haste DiceLoss.forward.

    y_pred:   (B, C, H, W) float (any float dtype; streamed natively)
    y_target: (B, 1, H, W) int labels (multiclass) or (B, C, H, W) (binary)
    """
    B, C, H, W = y_pred.shape
    HW = H * W
    # No wrapper upcast: the kernel casts to f32 on the VPU, so bf16 inputs are
    # read from HBM at half the bytes.
    pred = y_pred.reshape(B, C, HW)

    if hw_tile is None:
        hw_tile = _pick_hw_tile(HW, C, pred.dtype.itemsize)
    hw_tile = int(min(hw_tile, HW))
    if hw_tile != HW and hw_tile % _LANE != 0:
        raise ValueError("hw_tile must be a multiple of 128 or equal to H*W")
    num_hw = pl.cdiv(HW, hw_tile)
    need_mask = (num_hw * hw_tile != HW)

    if mode == "multiclass":
        if y_target.shape != (B, 1, H, W):
            raise ValueError("multiclass target must be (B,1,H,W) labels")
        tgt = y_target.reshape(B, 1, HW)
        if tgt.dtype != jnp.int32:
            tgt = tgt.astype(jnp.int32)
        kernel = functools.partial(_dice_multiclass_kernel,
                                   from_logits=from_logits, hw=HW,
                                   hw_tile=hw_tile, need_mask=need_mask)
        tgt_spec = pl.BlockSpec((1, 1, hw_tile), lambda b, h: (b, 0, h))
        tgt_block_bytes = hw_tile * 4
    elif mode == "binary":
        if y_target.shape != y_pred.shape:
            raise ValueError(
                f"Input ({y_pred.shape}) and target ({y_target.shape}) shapes do not match"
            )
        tgt = y_target.reshape(B, C, HW)
        if tgt.dtype == jnp.bool_:
            tgt = tgt.astype(jnp.int8)             # keep DMA bytes minimal
        kernel = functools.partial(_dice_binary_kernel,
                                   from_logits=from_logits, hw=HW,
                                   hw_tile=hw_tile, need_mask=need_mask)
        tgt_spec = pl.BlockSpec((1, C, hw_tile), lambda b, h: (b, 0, h))
        tgt_block_bytes = C * hw_tile * tgt.dtype.itemsize
    else:
        raise ValueError(f"unknown mode {mode}")

    pred_block_bytes = C * hw_tile * pred.dtype.itemsize
    # Explicit VMEM budget: 2x double-buffered inputs + slack; safe on v5e's
    # 16 MiB scoped default and far under v7x's 64 MiB physical.
    vmem_limit = int(min(max(2 * (pred_block_bytes + tgt_block_bytes) + (2 << 20),
                             16 << 20), 32 << 20))

    loss_bc1 = pl.pallas_call(
        kernel,
        out_shape=jax.ShapeDtypeStruct((B, C, 1), jnp.float32),
        grid_spec=pltpu.PrefetchScalarGridSpec(
            num_scalar_prefetch=0,
            grid=(B, num_hw),
            in_specs=[
                # TODO(synk): optionally pipeline_mode=pl.Buffered(3) on pred if
                # a trace still shows exposed DMA at the chosen HW tile.
                pl.BlockSpec((1, C, hw_tile), lambda b, h: (b, 0, h)),
                tgt_spec,
            ],
            # Per-batch output block, resident across the HW reduction axis.
            out_specs=pl.BlockSpec((1, C, 1), lambda b, h: (b, 0, 0)),
            scratch_shapes=[pltpu.VMEM((C, 1), jnp.float32),
                            pltpu.VMEM((C, 1), jnp.float32)],
        ),
        compiler_params=pltpu.CompilerParams(
            dimension_semantics=("parallel", "arbitrary"),
            vmem_limit_bytes=vmem_limit,
        ),
    )(pred, tgt)

    loss_bc = loss_bc1.reshape(B, C)
    if reduce:
        return jnp.mean(loss_bc)
    return loss_bc


def _reference(y_pred, y_target, *, mode, from_logits=True, reduce=True):
    """Pure-JAX reference mirroring the PyTorch module."""
    y_pred = y_pred.astype(jnp.float32)
    if from_logits:
        if mode == "binary":
            y_pred = jax.nn.sigmoid(y_pred)
        else:
            y_pred = jax.nn.softmax(y_pred, axis=1)
    if mode == "multiclass":
        C = y_pred.shape[1]
        y_target = jax.nn.one_hot(y_target[:, 0], C, axis=1, dtype=y_pred.dtype)
    y_target = y_target.astype(jnp.float32)
    inter = jnp.sum(y_pred * y_target, axis=(2, 3))
    denom = jnp.sum(y_pred, axis=(2, 3)) + jnp.sum(y_target, axis=(2, 3))
    dice = (2.0 * inter + EPS) / (denom + EPS)
    loss = 1.0 - dice
    return jnp.mean(loss) if reduce else loss


if __name__ == "__main__":
    key = jax.random.PRNGKey(0)
    k1, k2, k3, k4, k5, k6 = jax.random.split(key, 6)

    B, C, H, W = 2, 4, 16, 16

    # --- multiclass, HW tiled into 2 exact tiles ---
    logits_mc = jax.random.normal(k1, (B, C, H, W), dtype=jnp.float32)
    labels = jax.random.randint(k2, (B, 1, H, W), 0, C, dtype=jnp.int32)
    out_mc = dice_loss(logits_mc, labels, mode="multiclass",
                       from_logits=True, reduce=True, hw_tile=128)
    out_mc = jax.block_until_ready(out_mc)
    ref_mc = _reference(logits_mc, labels, mode="multiclass")
    assert jnp.allclose(out_mc, ref_mc, atol=1e-5, rtol=1e-5), (out_mc, ref_mc)

    # --- multiclass, partial last tile (exercises the lane mask) ---
    H2, W2 = 16, 24                                # HW = 384, tile 256
    logits_mc2 = jax.random.normal(k3, (B, C, H2, W2), dtype=jnp.float32)
    labels2 = jax.random.randint(k4, (B, 1, H2, W2), 0, C, dtype=jnp.int32)
    out_mc2 = dice_loss(logits_mc2, labels2, mode="multiclass",
                        from_logits=True, reduce=False, hw_tile=256)
    out_mc2 = jax.block_until_ready(out_mc2)
    ref_mc2 = _reference(logits_mc2, labels2, mode="multiclass", reduce=False)
    assert jnp.allclose(out_mc2, ref_mc2, atol=1e-5, rtol=1e-5), (out_mc2, ref_mc2)

    # --- binary, bf16 logits streamed in native dtype ---
    logits_bin = jax.random.normal(k5, (B, C, H, W),
                                   dtype=jnp.float32).astype(jnp.bfloat16)
    target_bin = (jax.random.uniform(k6, (B, C, H, W)) > 0.5).astype(jnp.float32)
    out_bin = dice_loss(logits_bin, target_bin, mode="binary",
                        from_logits=True, reduce=True, hw_tile=128)
    out_bin = jax.block_until_ready(out_bin)
    ref_bin = _reference(logits_bin, target_bin, mode="binary")
    assert jnp.allclose(out_bin, ref_bin, atol=1e-5, rtol=1e-5), (out_bin, ref_bin)

    print("KERNEL_OK")
</pallas_src>

<mosaic_0001>
module attributes {stable_mosaic.version = 11 : i64} {
  func.func @_dice_multiclass_kernel(%arg0: i32, %arg1: i32, %arg2: memref<1x4x128xf32, #tpu.memory_space<vmem>>, %arg3: memref<1x1x128xi32, #tpu.memory_space<vmem>>, %arg4: memref<1x4x1xf32, #tpu.memory_space<vmem>>, %arg5: memref<4x1xf32, #tpu.memory_space<vmem>>, %arg6: memref<4x1xf32, #tpu.memory_space<vmem>>) attributes {dimension_semantics = [#tpu.dimension_semantics<parallel>, #tpu.dimension_semantics<arbitrary>], iteration_bounds = array<i64: 2, 2>, scalar_prefetch = 0 : i64, scratch_operands = 2 : i64, tpu.core_type = #tpu.core_type<tc>, window_params = [{transform_indices = @transform_0, window_bounds = array<i64: 1, 4, 128>}, {transform_indices = @transform_1, window_bounds = array<i64: 1, 1, 128>}, {transform_indices = @transform_2, window_bounds = array<i64: 1, 4, 1>}]} {
    %c0_i32 = arith.constant 0 : i32
    %0 = arith.cmpi eq, %arg1, %c0_i32 : i32
    %1 = arith.extui %0 : i1 to i32
    %c0_i32_0 = arith.constant 0 : i32
    %2 = arith.cmpi ne, %1, %c0_i32_0 : i32
    scf.if %2 {
      %cst_18 = arith.constant 0.000000e+00 : f32
      %36 = vector.broadcast %cst_18 : f32 to vector<4x1xf32>
      %c0_19 = arith.constant 0 : index
      %c0_20 = arith.constant 0 : index
      %37 = vector.load %arg5[%c0_19, %c0_20] : memref<4x1xf32, #tpu.memory_space<vmem>>, vector<4x1xf32>
      tpu.vector_store %arg5[%c0_19, %c0_20], %36 {strides = array<i32>} : memref<4x1xf32, #tpu.memory_space<vmem>>, vector<4x1xf32>,
      %cst_21 = arith.constant 0.000000e+00 : f32
      %38 = vector.broadcast %cst_21 : f32 to vector<4x1xf32>
      %c0_22 = arith.constant 0 : index
      %c0_23 = arith.constant 0 : index
      %39 = vector.load %arg6[%c0_22, %c0_23] : memref<4x1xf32, #tpu.memory_space<vmem>>, vector<4x1xf32>
      tpu.vector_store %arg6[%c0_22, %c0_23], %38 {strides = array<i32>} : memref<4x1xf32, #tpu.memory_space<vmem>>, vector<4x1xf32>,
    } else {
    }
    %c0 = arith.constant 0 : index
    %c0_1 = arith.constant 0 : index
    %c0_2 = arith.constant 0 : index
    %3 = vector.load %arg2[%c0, %c0_1, %c0_2] : memref<1x4x128xf32, #tpu.memory_space<vmem>>, vector<1x4x128xf32>
    %4 = vector.shape_cast %3 : vector<1x4x128xf32> to vector<4x128xf32>
    %c0_3 = arith.constant 0 : index
    %c0_4 = arith.constant 0 : index
    %c0_5 = arith.constant 0 : index
    %5 = vector.load %arg3[%c0_3, %c0_4, %c0_5] : memref<1x1x128xi32, #tpu.memory_space<vmem>>, vector<1x1x128xi32>
    %6 = vector.shape_cast %5 : vector<1x1x128xi32> to vector<1x128xi32>
    %cst = arith.constant dense<0xFF800000> : vector<128xf32>
    %7 = vector.multi_reduction <maximumf>, %4, %cst [0] : vector<4x128xf32> to vector<128xf32>
    %8 = vector.shape_cast %7 : vector<128xf32> to vector<1x128xf32>
    %9 = vector.broadcast %8 : vector<1x128xf32> to vector<4x128xf32>
    %10 = arith.subf %4, %9 : vector<4x128xf32>
    %11 = math.exp %10 : vector<4x128xf32>
    %cst_6 = arith.constant dense<0.000000e+00> : vector<128xf32>
    %12 = vector.multi_reduction <add>, %11, %cst_6 [0] : vector<4x128xf32> to vector<128xf32>
    %13 = vector.shape_cast %12 : vector<128xf32> to vector<1x128xf32>
    %14 = vector.broadcast %13 : vector<1x128xf32> to vector<4x128xf32>
    %15 = arith.divf %11, %14 : vector<4x128xf32>
    %16 = tpu.iota {dimensions = array<i32: 0>} : vector<4x128xi32>
    %17 = vector.broadcast %6 : vector<1x128xi32> to vector<4x128xi32>
    %18 = arith.cmpi eq, %16, %17 : vector<4x128xi32>
    %19 = arith.extui %18 : vector<4x128xi1> to vector<4x128xi32>
    %20 = arith.sitofp %19 : vector<4x128xi32> to vector<4x128xf32>
    %c0_7 = arith.constant 0 : index
    %c0_8 = arith.constant 0 : index
    %21 = vector.load %arg5[%c0_7, %c0_8] : memref<4x1xf32, #tpu.memory_space<vmem>>, vector<4x1xf32>
    %22 = arith.mulf %15, %20 : vector<4x128xf32>
    %cst_9 = arith.constant dense<0.000000e+00> : vector<4xf32>
    %23 = vector.multi_reduction <add>, %22, %cst_9 [1] : vector<4x128xf32> to vector<4xf32>
    %24 = vector.shape_cast %23 : vector<4xf32> to vector<4x1xf32>
    %25 = arith.addf %21, %24 : vector<4x1xf32>
    %c0_10 = arith.constant 0 : index
    %c0_11 = arith.constant 0 : index
    %26 = vector.load %arg5[%c0_10, %c0_11] : memref<4x1xf32, #tpu.memory_space<vmem>>, vector<4x1xf32>
    tpu.vector_store %arg5[%c0_10, %c0_11], %25 {strides = array<i32>} : memref<4x1xf32, #tpu.memory_space<vmem>>, vector<4x1xf32>,
    %c0_12 = arith.constant 0 : index
    %c0_13 = arith.constant 0 : index
    %27 = vector.load %arg6[%c0_12, %c0_13] : memref<4x1xf32, #tpu.memory_space<vmem>>, vector<4x1xf32>
    %28 = arith.addf %15, %20 : vector<4x128xf32>
    %cst_14 = arith.constant dense<0.000000e+00> : vector<4xf32>
    %29 = vector.multi_reduction <add>, %28, %cst_14 [1] : vector<4x128xf32> to vector<4xf32>
    %30 = vector.shape_cast %29 : vector<4xf32> to vector<4x1xf32>
    %31 = arith.addf %27, %30 : vector<4x1xf32>
    %c0_15 = arith.constant 0 : index
    %c0_16 = arith.constant 0 : index
    %32 = vector.load %arg6[%c0_15, %c0_16] : memref<4x1xf32, #tpu.memory_space<vmem>>, vector<4x1xf32>
    tpu.vector_store %arg6[%c0_15, %c0_16], %31 {strides = array<i32>} : memref<4x1xf32, #tpu.memory_space<vmem>>, vector<4x1xf32>,
    %c1_i32 = arith.constant 1 : i32
    %33 = arith.cmpi eq, %arg1, %c1_i32 : i32
    %34 = arith.extui %33 : i1 to i32
    %c0_i32_17 = arith.constant 0 : i32
    %35 = arith.cmpi ne, %34, %c0_i32_17 : i32
    scf.if %35 {
      %c0_18 = arith.constant 0 : index
      %c0_19 = arith.constant 0 : index
      %36 = vector.load %arg5[%c0_18, %c0_19] : memref<4x1xf32, #tpu.memory_space<vmem>>, vector<4x1xf32>
      %cst_20 = arith.constant 2.000000e+00 : f32
      %37 = vector.broadcast %cst_20 : f32 to vector<4x1xf32>
      %38 = arith.mulf %37, %36 : vector<4x1xf32>
      %cst_21 = arith.constant 9.99999974E-6 : f32
      %39 = vector.broadcast %cst_21 : f32 to vector<4x1xf32>
      %40 = arith.addf %38, %39 : vector<4x1xf32>
      %c0_22 = arith.constant 0 : index
      %c0_23 = arith.constant 0 : index
      %41 = vector.load %arg6[%c0_22, %c0_23] : memref<4x1xf32, #tpu.memory_space<vmem>>, vector<4x1xf32>
      %cst_24 = arith.constant 9.99999974E-6 : f32
      %42 = vector.broadcast %cst_24 : f32 to vector<4x1xf32>
      %43 = arith.addf %41, %42 : vector<4x1xf32>
      %44 = arith.divf %40, %43 : vector<4x1xf32>
      %cst_25 = arith.constant 1.000000e+00 : f32
      %45 = vector.broadcast %cst_25 : f32 to vector<4x1xf32>
      %46 = arith.subf %45, %44 : vector<4x1xf32>
      %47 = vector.shape_cast %46 : vector<4x1xf32> to vector<1x4x1xf32>
      %c0_26 = arith.constant 0 : index
      %c0_27 = arith.constant 0 : index
      %c0_28 = arith.constant 0 : index
      %48 = vector.load %arg4[%c0_26, %c0_27, %c0_28] : memref<1x4x1xf32, #tpu.memory_space<vmem>>, vector<1x4x1xf32>
      tpu.vector_store %arg4[%c0_26, %c0_27, %c0_28], %47 {strides = array<i32>} : memref<1x4x1xf32, #tpu.memory_space<vmem>>, vector<1x4x1xf32>,
    } else {
    }
    return
  }
  func.func @transform_0(%arg0: i32, %arg1: i32) -> (i32, i32, i32) {
    %c0_i32 = arith.constant 0 : i32
    %c0_i32_0 = arith.constant 0 : i32
    return %arg0, %c0_i32, %arg1 : i32, i32, i32
  }
  func.func @transform_1(%arg0: i32, %arg1: i32) -> (i32, i32, i32) {
    %c0_i32 = arith.constant 0 : i32
    %c0_i32_0 = arith.constant 0 : i32
    return %arg0, %c0_i32, %arg1 : i32, i32, i32
  }
  func.func @transform_2(%arg0: i32, %arg1: i32) -> (i32, i32, i32) {
    %c0_i32 = arith.constant 0 : i32
    %c0_i32_0 = arith.constant 0 : i32
    %c0_i32_1 = arith.constant 0 : i32
    return %arg0, %c0_i32, %c0_i32_0 : i32, i32, i32
  }
}

</mosaic_0001>

<llo_original>
// kernel: tpu_custom_call.1
$region0: #{tpu_custom_call.1}
  #allocation0 [shape = 'u32[]', space=smem, size = 0x4, offset = 0x4, fixed_abs, tag = 'smem constant byte address 0x4 - core index']
  #allocation1 [shape = 'u32[144,128]{1,0:T(1,128)}', space=vmem, size = 0x12000, scoped, tag = 'internal scratch']
  #allocation2 [shape = 'f32[4,1]{1,0:T(4,128)}', space=vmem, size = 0x800, scoped, tag = 'scratch operand']
  #allocation3 [shape = 'f32[4,1]{1,0:T(4,128)}', space=vmem, size = 0x800, scoped, tag = 'scratch operand']
  %s0 = inlined_call_operand.hbm [shape: f32[2,4,256], index: 0, kind: input, shape index: {}]
  %s1 = inlined_call_operand.hbm [shape: s32[2,1,256], index: 1, kind: input, shape index: {}]
  %s2 = inlined_call_operand.vmem [shape: f32[2,4,1], index: 2, kind: output, shape index: {}]
  %s3 = sld [smem:[#allocation0]]
  $region57: #{tpu_custom_call.1} parent=0
    _
  %s5 = ssub.s32 1, %s3
  %s6 = scalar_select 0, %s5, %s3
  $region1: #{tpu_custom_call.1} parent=0
    #allocation4 [shape = 'u8[4096]{0}', space=vmem, size = 0x1000, scoped, tag = 'input window, operand 0']
    #allocation5 [shape = 's32[2]{0}', space=sflag, size = 0x8, scoped, tag = 'scoped memory for tpu_custom_call.1']
    #allocation6 [shape = 'u8[1024]{0}', space=vmem, size = 0x400, scoped, tag = 'input window, operand 1']
    #allocation7 [shape = 's32[2]{0}', space=sflag, size = 0x8, scoped, tag = 'scoped memory for tpu_custom_call.1']
    %7 = vsyncpa [#allocation5], 0
    %s8 = scalar_lea.sflag [#allocation5], 1
    %9 = vsyncpa %s8, 0
    %10 = vsyncpa [#allocation7], 0
    %s11 = scalar_lea.sflag [#allocation7], 1
    %12 = vsyncpa %s11, 0
    loop: start=0, step=1, limit=6
    $region2: #{tpu_custom_call.1} parent=1 // loop_pre_header
      _
    $region3: #{tpu_custom_call.1} parent=1 // loop_header
      %s14 = sphi 0, %s18
      %p15 = scmp.ge.s32.totalorder %s14, 6
      %s21 = sphi 0, %s33
      %s22 = sphi 0, %s29
      %s23 = sphi 0, %s21
      %s24 = sphi 0, %s22
      %s25 = sphi 0, %s23
      %s26 = sphi 0, %s24
      %s38 = sphi 0, %s40
      %s41 = sphi 0, %s38
      %s42 = sphi 0, %s41
      %s58 = sphi 0, %s42
      %s66 = sphi 0, %s68
      %s69 = sphi 0, %s66
      %s70 = sphi 0, %s69
      %s86 = sphi 0, %s70
      %s92 = sphi 0, %s94
      %s95 = sphi 0, %s92
      %s96 = sphi 0, %s95
      %s112 = sphi 0, %s96
    $region4: #{tpu_custom_call.1} parent=1 // loop_header_branch
      %17 = sbr.rel (%p15) target = $region8
    $region5: #{tpu_custom_call.1} parent=1 // loop_body
      %s19 = ssub.s32 %s14, 1
      %s20 = ssub.s32 %s14, 2
      %s27 = sadd.s32 1, %s22
      %p28 = scmp.ge.s32.totalorder %s27, 2
      %s29 = scalar_select %p28, 0, %s27
      %s30 = sadd.s32 1, %s21
      %s31 = scalar_select %p28, %s30, %s21
      %p32 = scmp.ge.s32.totalorder %s31, 2
      %s33 = scalar_select %p32, 0, %s31
      %s34 = ssub.s32 %s21, %s33
      %s35 = ssub.s32 %s22, %s29
      %s36 = sor.u32 %s34, %s35
      %p37 = scmp.eq.s32.totalorder %s36, 0
      %s39 = sadd.s32 %s38, 1
      %s40 = scalar_select %p37, %s38, %s39
      %p43 = pneg %p37
      %p44 = scmp.eq.s32.totalorder %s14, 3
      %p45 = por %p43, %p44
      %p46 = scmp.ne.s32.totalorder %s38, %s41
      %p47 = scmp.eq.s32.totalorder %s14, 0
      %p48 = por %p46, %p47
      %p49 = scmp.ne.s32.totalorder %s38, %s41
      %p50 = scmp.eq.s32.totalorder %s19, 3
      %p51 = por %p49, %p50
      %p52 = scmp.ne.s32.totalorder %s41, %s42
      %p53 = scmp.eq.s32.totalorder %s19, 0
      %p54 = por %p52, %p53
      %p55 = scmp.ne.s32.totalorder %s41, %s42
      %p56 = scmp.eq.s32.totalorder %s20, 3
      %p57 = por %p55, %p56
      %p59 = scmp.ne.s32.totalorder %s42, %s58
      %p60 = scmp.eq.s32.totalorder %s20, 0
      %p61 = por %p59, %p60
      %s62 = ssub.s32 %s21, %s33
      %s63 = ssub.s32 %s22, %s29
      %s64 = sor.u32 %s62, %s63
      %p65 = scmp.eq.s32.totalorder %s64, 0
      %s67 = sadd.s32 %s66, 1
      %s68 = scalar_select %p65, %s66, %s67
      %p71 = pneg %p65
      %p72 = scmp.eq.s32.totalorder %s14, 3
      %p73 = por %p71, %p72
      %p74 = scmp.ne.s32.totalorder %s66, %s69
      %p75 = scmp.eq.s32.totalorder %s14, 0
      %p76 = por %p74, %p75
      %p77 = scmp.ne.s32.totalorder %s66, %s69
      %p78 = scmp.eq.s32.totalorder %s19, 3
      %p79 = por %p77, %p78
      %p80 = scmp.ne.s32.totalorder %s69, %s70
      %p81 = scmp.eq.s32.totalorder %s19, 0
      %p82 = por %p80, %p81
      %p83 = scmp.ne.s32.totalorder %s69, %s70
      %p84 = scmp.eq.s32.totalorder %s20, 3
      %p85 = por %p83, %p84
      %p87 = scmp.ne.s32.totalorder %s70, %s86
      %p88 = scmp.eq.s32.totalorder %s20, 0
      %p89 = por %p87, %p88
      %s90 = ssub.s32 %s21, %s33
      %p91 = scmp.eq.s32.totalorder %s90, 0
      %s93 = sadd.s32 %s92, 1
      %s94 = scalar_select %p91, %s92, %s93
      %p97 = pneg %p91
      %p98 = scmp.eq.s32.totalorder %s14, 3
      %p99 = por %p97, %p98
      %p100 = scmp.ne.s32.totalorder %s92, %s95
      %p101 = scmp.eq.s32.totalorder %s14, 0
      %p102 = por %p100, %p101
      %p103 = scmp.ne.s32.totalorder %s92, %s95
      %p104 = scmp.eq.s32.totalorder %s19, 3
      %p105 = por %p103, %p104
      %p106 = scmp.ne.s32.totalorder %s95, %s96
      %p107 = scmp.eq.s32.totalorder %s19, 0
      %p108 = por %p106, %p107
      %p109 = scmp.ne.s32.totalorder %s95, %s96
      %p110 = scmp.eq.s32.totalorder %s20, 3
      %p111 = por %p109, %p110
      %p113 = scmp.ne.s32.totalorder %s96, %s112
      %p114 = scmp.eq.s32.totalorder %s20, 0
      %p115 = por %p113, %p114
      %p116 = scmp.le.s32.totalorder 1, %s14
      %p117 = scmp.lt.s32.totalorder %s14, 5
      %p118 = pnand %p116, %p117
      %p119 = pneg %p118
      // Predicated region
      $region9: #{tpu_custom_call.1} parent=5 // pred_check
        _
      $region10: #{tpu_custom_call.1} parent=5 // pred_check_branch
        %121 = sbr.rel (%p118) target = $region12
      $region11: #{tpu_custom_call.1} parent=5 // pred_region
        %s122 = ssub.s32 %s14, 1
      $region12: #{tpu_custom_call.1} parent=5 // pred_fallthru
        _
      %p123 = scmp.lt.s32.totalorder %s14, 4
      // Predicated region
      $region13: #{tpu_custom_call.1} parent=5 // pred_check
        %p124 = pneg %p123
      $region14: #{tpu_custom_call.1} parent=5 // pred_check_branch
        %126 = sbr.rel (%p124) target = $region16
      $region15: #{tpu_custom_call.1} parent=5 // pred_region
        // Predicated region
        $region17: #{tpu_custom_call.1} parent=15 // pred_check
          %p127 = pneg %p48
        $region18: #{tpu_custom_call.1} parent=15 // pred_check_branch
          %129 = sbr.rel (%p127) target = $region20
        $region19: #{tpu_custom_call.1} parent=15 // pred_region
          %s130 = sand.u32 %s38, 1
          %s131 = scalar_lea.sflag [#allocation5], %s130
          %s132 = sand.u32 %s38, 1
          %s133 = smul.addr %s132, 4
          %s134 = scalar_lea.vmem [#allocation4], %s133
          %s136 = ssub.s32 64, 64
          %137 = vsyncadd %s131, %s136
          %s138 = smul.addr %s21, 2
          %s139 = sadd.s32 %s22, %s138
          %s140 = smul.addr %s139, 64
          %s141 = scalar_lea.hbm %s0, %s140
          %s143 = sshll.u32 %s134, 4
          %s144 = int_to_ptr.vmem [resolvable:$true] %s143
          %146 = dma.hbm_to_vmem [thread:$0]  %s141, 64, %s144, %s131
        $region20: #{tpu_custom_call.1} parent=15 // pred_fallthru
          _
        // Predicated region
        $region21: #{tpu_custom_call.1} parent=15 // pred_check
          %p147 = pneg %p76
        $region22: #{tpu_custom_call.1} parent=15 // pred_check_branch
          %149 = sbr.rel (%p147) target = $region24
        $region23: #{tpu_custom_call.1} parent=15 // pred_region
          %s150 = sand.u32 %s66, 1
          %s151 = scalar_lea.sflag [#allocation7], %s150
          %s152 = sand.u32 %s66, 1
          %s153 = scalar_lea.vmem [#allocation6], %s152
          %s155 = ssub.s32 16, 16
          %156 = vsyncadd %s151, %s155
          %s157 = smul.addr %s21, 2
          %s158 = sadd.s32 %s22, %s157
          %s159 = smul.addr %s158, 16
          %s160 = scalar_lea.hbm %s1, %s159
          %s162 = sshll.u32 %s153, 4
          %s163 = int_to_ptr.vmem [resolvable:$true] %s162
          %165 = dma.hbm_to_vmem [thread:$0]  %s160, 16, %s163, %s151
        $region24: #{tpu_custom_call.1} parent=15 // pred_fallthru
          _
      $region16: #{tpu_custom_call.1} parent=5 // pred_fallthru
        _
      %p166 = scmp.le.s32.totalorder 1, %s14
      %p167 = scmp.lt.s32.totalorder %s14, 5
      %p168 = pnand %p166, %p167
      %p169 = pneg %p168
      // Predicated region
      $region25: #{tpu_custom_call.1} parent=5 // pred_check
        _
      $region26: #{tpu_custom_call.1} parent=5 // pred_check_branch
        %171 = sbr.rel (%p168) target = $region28
      $region27: #{tpu_custom_call.1} parent=5 // pred_region
        %s172 = ssub.s32 %s14, 1
        %s173 = sand.u32 %s41, 1
        %s174 = scalar_lea.sflag [#allocation5], %s173
        %s175 = sand.u32 %s41, 1
        %s176 = smul.addr %s175, 4
        %s177 = scalar_lea.vmem [#allocation4], %s176
        // Predicated region
        $region29: #{tpu_custom_call.1} parent=27 // pred_check
          %p178 = pneg %p54
        $region30: #{tpu_custom_call.1} parent=27 // pred_check_branch
          %180 = sbr.rel (%p178) target = $region32
        $region31: #{tpu_custom_call.1} parent=27 // pred_region
          %181 = dma.done %s174, 64
        $region32: #{tpu_custom_call.1} parent=27 // pred_fallthru
          _
        %s182 = sand.u32 %s69, 1
        %s183 = scalar_lea.sflag [#allocation7], %s182
        %s184 = sand.u32 %s69, 1
        %s185 = scalar_lea.vmem [#allocation6], %s184
        // Predicated region
        $region33: #{tpu_custom_call.1} parent=27 // pred_check
          %p186 = pneg %p82
        $region34: #{tpu_custom_call.1} parent=27 // pred_check_branch
          %188 = sbr.rel (%p186) target = $region36
        $region35: #{tpu_custom_call.1} parent=27 // pred_region
          %189 = dma.done %s183, 16
        $region36: #{tpu_custom_call.1} parent=27 // pred_fallthru
          _
        %s190 = sand.u32 %s41, 1
        %s191 = scalar_lea.sflag [#allocation5], %s190
        %s192 = sand.u32 %s41, 1
        %s193 = smul.addr %s192, 4
        %s194 = scalar_lea.vmem [#allocation4], %s193
        %p195 = pneg %p54
        %p196 = pneg %p51
        %s197 = sand.u32 %s69, 1
        %s198 = scalar_lea.sflag [#allocation7], %s197
        %s199 = sand.u32 %s69, 1
        %s200 = scalar_lea.vmem [#allocation6], %s199
        %p201 = pneg %p82
        %p202 = pneg %p79
        %p203 = pneg %p108
        %p204 = pneg %p105
        %p205 = scmp.lt.s32.totalorder %s23, 1
        %s206 = scalar_select %p205, %s23, 1
        %s207 = smul.addr %s206, 4
        %s208 = scalar_lea.vmem %s2, %s207
        %p209 = scmp.lt.s32.totalorder %s23, 1
        %s210 = scalar_select %p209, %s23, 1
        %s211 = smul.addr %s210, 4
        %s212 = scalar_lea.vmem %s2, %s211
        %p213 = scmp.eq.s32.totalorder %s24, 0
        // Predicated region
        $region37: #{tpu_custom_call.1} parent=27 // pred_check
          %p214 = pneg %p213
        $region38: #{tpu_custom_call.1} parent=27 // pred_check_branch
          %216 = sbr.rel (%p214) target = $region40
        $region39: #{tpu_custom_call.1} parent=27 // pred_region
          %vm217 = vcmask 3072
          %218 = vst.msk [vmem:[#allocation2] sm:$0xf] %vm217, 0.0
          %219 = vst.msk [vmem:[#allocation3] sm:$0xf] %vm217, 0.0
        $region40: #{tpu_custom_call.1} parent=27 // pred_fallthru
          _
        %v220 = vld [vmem:[%s177] sm:$0xf]
        %v221 = vld [vmem:[%s185] sm:$0x1]
        %vm222 = vcmask 1043456
        %v223 = vsel %vm222, %v220, -inf
        %v224 = vrot.slane %v223, 4
        %v225 = vmax.f32 %v223, %v224
        %v226 = vrot.slane %v225, 2
        %v227 = vmax.f32 %v225, %v226
        %v228 = vrot.slane %v227, 1
        %v229 = vmax.f32 %v227, %v228
        %v230 = vsub.f32 %v220, %v229
        %v231 = vmul.f32 %v230, 1.442695
        %v232 = vpow.pop %v231
        %v233 = vsel %vm222, %v232, 0.0
        %v234 = vrot.slane %v233, 4
        %v235 = vadd.f32 %v233, %v234
        %v236 = vrot.slane %v235, 2
        %v237 = vadd.f32 %v235, %v236
        %v238 = vrot.slane %v237, 1
        %v239 = vadd.f32 %v237, %v238
        %v240 = vrcp.pop %v239
        %v241 = vmul.f32 %v232, %v240
        %v242 = vlaneseq
        %v243 = vshrl.u32 %v242, 7
        %v244 = vlaneseq
        %v245 = vshrl.u32 %v244, 7
        %v246 = vsub.s32 0, %v245
        %v247 = vrot.slane %v221, %v246
        %vm248 = vcmp.eq.s32.totalorder %v243, %v247
        %v249 = vsel %vm248, 1, 0
        %v250 = vcvt.s32.f32 %v249
        %v251 = vld [vmem:[#allocation2] sm:$0xf]
        %v252 = vmul.f32 %v241, %v250
        %v253 = vsel %vm222, %v252, 0.0
        %254 = vadd.xlane.f32.xlu0 %v253
        %v255 = vpop.xlane.xlu0 %254
        %v256 = vadd.f32 %v251, %v255
        %vm257 = vcmask 3072
        %258 = vst.msk [vmem:[#allocation2] sm:$0xf] %vm257, %v256
        %v259 = vld [vmem:[#allocation3] sm:$0xf]
        %v260 = vadd.f32 %v241, %v250
        %v261 = vsel %vm222, %v260, 0.0
        %262 = vadd.xlane.f32.xlu0 %v261
        %v263 = vpop.xlane.xlu0 %262
        %v264 = vadd.f32 %v259, %v263
        %265 = vst.msk [vmem:[#allocation3] sm:$0xf] %vm257, %v264
        %p266 = scmp.eq.s32.totalorder %s24, 1
        // Predicated region
        $region41: #{tpu_custom_call.1} parent=27 // pred_check
          %p267 = pneg %p266
        $region42: #{tpu_custom_call.1} parent=27 // pred_check_branch
          %269 = sbr.rel (%p267) target = $region44
        $region43: #{tpu_custom_call.1} parent=27 // pred_region
          %v270 = vld [vmem:[#allocation2] sm:$0xf]
          %v271 = vmul.f32 %v270, 2.0
          %v272 = vadd.f32 %v271, 1e-05
          %v273 = vld [vmem:[#allocation3] sm:$0xf]
          %v274 = vadd.f32 %v273, 1e-05
          %v275 = vrcp.pop %v274
          %v276 = vmul.f32 %v272, %v275
          %v277 = vsub.f32 1.0, %v276
          %278 = vst.msk [vmem:[%s212] sm:$0xf] %vm257, %v277
        $region44: #{tpu_custom_call.1} parent=27 // pred_fallthru
          _
        %p279 = scmp.lt.s32.totalorder %s23, 1
        %s280 = scalar_select %p279, %s23, 1
        %s281 = smul.addr %s280, 4
        %s282 = scalar_lea.vmem %s2, %s281
        // Predicated region
        $region45: #{tpu_custom_call.1} parent=27 // pred_check
          %p283 = pneg %p105
        $region46: #{tpu_custom_call.1} parent=27 // pred_check_branch
          %285 = sbr.rel (%p283) target = $region48
        $region47: #{tpu_custom_call.1} parent=27 // pred_region
          _
        $region48: #{tpu_custom_call.1} parent=27 // pred_fallthru
          _
      $region28: #{tpu_custom_call.1} parent=5 // pred_fallthru
        _
      %p286 = scmp.le.s32.totalorder 2, %s14
      // Predicated region
      $region49: #{tpu_custom_call.1} parent=5 // pred_check
        %p287 = pneg %p286
      $region50: #{tpu_custom_call.1} parent=5 // pred_check_branch
        %289 = sbr.rel (%p287) target = $region52
      $region51: #{tpu_custom_call.1} parent=5 // pred_region
        %s290 = ssub.s32 %s14, 2
        // Predicated region
        $region53: #{tpu_custom_call.1} parent=51 // pred_check
          %p291 = pneg %p111
        $region54: #{tpu_custom_call.1} parent=51 // pred_check_branch
          %293 = sbr.rel (%p291) target = $region56
        $region55: #{tpu_custom_call.1} parent=51 // pred_region
          %p294 = scmp.lt.s32.totalorder %s25, 1
          %s295 = scalar_select %p294, %s25, 1
          %s296 = smul.addr %s295, 4
          %s297 = scalar_lea.vmem %s2, %s296
        $region56: #{tpu_custom_call.1} parent=51 // pred_fallthru
          _
      $region52: #{tpu_custom_call.1} parent=5 // pred_fallthru
        _
    $region6: #{tpu_custom_call.1} parent=1 // loop_footer
      %s18 = sadd.s32 1, %s14
    $region7: #{tpu_custom_call.1} parent=1 // loop_footer_branch
      %13 = sbr.rel target = $region3
    $region8: #{tpu_custom_call.1} parent=1 // loop_exit
      _
    %298 = vsyncpa [#allocation5], 1
    %s299 = scalar_lea.sflag [#allocation5], 1
    %300 = vsyncpa %s299, 1
    %301 = vsyncpa [#allocation7], 1
    %s302 = scalar_lea.sflag [#allocation7], 1
    %303 = vsyncpa %s302, 1

</llo_original>
